<compile_context>
chip_gen: v6e
topology: v6e:2x2x1
jax: 0.10.0
libtpu: 0.0.40
codegen_flags: <defaults>
</compile_context>

<pallas_src>
import jax
import jax.numpy as jnp
from jax.experimental import pallas as pl
from jax.experimental.pallas import tpu as pltpu


def _nli_mapper_kernel(h_ref, c_ref, base_ref, wh_ref, ho_ref, co_ref):
    # h_ref, c_ref : (TM, H)   flattened (layer*batch) row slabs
    # base_ref     : (TM, TN)  float32, = infersent @ Wn + b replicated per row
    # wh_ref       : (H, TN)   hidden part of the fused Linear weight
    # ho_ref, co_ref: (TM, TN) outputs
    wh = wh_ref[...]
    base = base_ref[...]
    acc_h = jnp.dot(h_ref[...], wh, preferred_element_type=jnp.float32) + base
    acc_c = jnp.dot(c_ref[...], wh, preferred_element_type=jnp.float32) + base
    ho_ref[...] = jnp.maximum(acc_h, 0.0).astype(ho_ref.dtype)
    co_ref[...] = jnp.maximum(acc_c, 0.0).astype(co_ref.dtype)


def _vmem_limit_bytes():
    """~48 MiB on v7x (64 MiB VMEM/TC), ~112 MiB on v5e/v6e (128 MiB VMEM)."""
    cap = 64 * 1024 * 1024
    try:
        cap = int(getattr(pltpu.get_tpu_info(), "vmem_capacity_bytes", cap))
    except Exception:
        pass
    return max(32 * 1024 * 1024, min(cap - 16 * 1024 * 1024, 112 * 1024 * 1024))


def _choose_tiles(M, H, N_pad, itemsize=4, budget=24 * 1024 * 1024):
    """Pick (TM, TN). Prefer TN == N_pad (weight resident once, nn == 1)."""

    def row_tile():
        for cand in (512, 256, 128, 64, 32, 16, 8):
            if M % cand == 0:
                return cand
        return M  # full extent is always a legal block shape

    def footprint(tm, tn):
        # every block is double-buffered: h + c + base + weight + two outputs
        return 2 * itemsize * (2 * tm * H + tm * tn + H * tn + 2 * tm * tn)

    for tn in (N_pad, 1024, 512, 256, 128):  # widest (lane-dense) first
        if tn > N_pad or N_pad % tn != 0:
            continue
        tm = row_tile()
        while (footprint(tm, tn) > budget and tm % 2 == 0 and tm >= 16
               and M % (tm // 2) == 0):
            tm //= 2
        if footprint(tm, tn) <= budget:
            return tm, tn
    return row_tile(), 128  # N_pad is always a multiple of 128


def lstm_nli_mapper_forward(encoder_hidden, infersent_input, params):
    """JAX/Pallas equivalent of LSTMNLIMapper.forward.

    encoder_hidden: tuple (h, c), each (L, B, H)
    infersent_input: (B, D)
    params: {"h_weight": (N, H+D) torch-Linear layout, "h_bias": (N,)}
            (the module's c_mapper params are never used by the reference forward)
    """
    h, c = encoder_hidden
    L, B, H = h.shape
    D = infersent_input.shape[-1]
    w = params["h_weight"]                       # (N, H+D)
    b = params["h_bias"]                         # (N,)
    N = w.shape[0]

    # Lane-dense output: pad the feature dim up to a multiple of 128.
    N_pad = ((N + 127) // 128) * 128
    wt = w.T                                     # (H+D, N); concat order [hidden, infersent]
    if N_pad != N:
        wt = jnp.pad(wt, ((0, 0), (0, N_pad - N)))
        b_p = jnp.pad(b, (0, N_pad - N))
    else:
        b_p = b
    w_h = wt[:H]                                 # (H, N_pad)  -> goes through the kernel
    w_n = wt[H:]                                 # (D, N_pad)  -> folded into `base` once

    # Hoisted once (same for every layer and for both h and c).
    base = (infersent_input.astype(jnp.float32) @ w_n.astype(jnp.float32)
            + b_p.astype(jnp.float32))           # (B, N_pad), float32

    # Flatten (L, B) -> M rows (zero-copy for row-major layout) and replicate
    # `base` to the same row order (row l*B + b  <-  base[b]).
    M = L * B
    h2 = h.reshape(M, H)
    c2 = c.reshape(M, H)
    base_rows = jnp.broadcast_to(base[None], (L, B, N_pad)).reshape(M, N_pad)

    TM, TN = _choose_tiles(M, H, N_pad, itemsize=4)
    nm = M // TM if M % TM == 0 else 1
    nn = N_pad // TN

    out_h, out_c = pl.pallas_call(
        _nli_mapper_kernel,
        out_shape=(jax.ShapeDtypeStruct((M, N_pad), h.dtype),
                   jax.ShapeDtypeStruct((M, N_pad), c.dtype)),
        grid=(nn, nm),                            # N-tile outermost: each weight tile DMA'd once
        in_specs=[
            pl.BlockSpec((TM, H),  lambda j, i: (i, 0)),   # h rows
            pl.BlockSpec((TM, H),  lambda j, i: (i, 0)),   # c rows
            pl.BlockSpec((TM, TN), lambda j, i: (i, j)),   # hoisted base term
            pl.BlockSpec((H, TN),  lambda j, i: (0, j)),   # weight tile
        ],
        out_specs=(
            pl.BlockSpec((TM, TN), lambda j, i: (i, j)),
            pl.BlockSpec((TM, TN), lambda j, i: (i, j)),
        ),
        compiler_params=pltpu.CompilerParams(
            dimension_semantics=("parallel", "parallel"),
            vmem_limit_bytes=_vmem_limit_bytes(),
        ),
    )(h2, c2, base_rows, w_h)

    # Drop lane padding (no-op when N % 128 == 0) and restore (L, B, N).
    out_h = out_h[:, :N].reshape(L, B, N)
    out_c = out_c[:, :N].reshape(L, B, N)
    return out_h, out_c


def init_params(key, nli_dim, hidden_size):
    # torch.nn.Linear default init: U(-1/sqrt(fan_in), 1/sqrt(fan_in)).
    # Only h_mapper params matter: the reference forward never uses c_mapper.
    fan_in = nli_dim + hidden_size
    bound = 1.0 / jnp.sqrt(jnp.float32(fan_in))
    k_w, k_b = jax.random.split(key)
    w = jax.random.uniform(k_w, (hidden_size, fan_in), jnp.float32,
                           minval=-bound, maxval=bound)
    b = jax.random.uniform(k_b, (hidden_size,), jnp.float32,
                           minval=-bound, maxval=bound)
    return {"h_weight": w, "h_bias": b}


if __name__ == "__main__":
    nli_dim = 64
    hidden_size = 32
    L, B = 2, 4

    key = jax.random.PRNGKey(0)
    k_h, k_c, k_inf, k_p = jax.random.split(key, 4)
    h = jax.random.normal(k_h, (L, B, hidden_size), jnp.float32)
    c = jax.random.normal(k_c, (L, B, hidden_size), jnp.float32)
    infersent = jax.random.normal(k_inf, (B, nli_dim), jnp.float32)
    params = init_params(k_p, nli_dim, hidden_size)

    h_out, c_out = jax.jit(lstm_nli_mapper_forward)((h, c), infersent, params)
    jax.block_until_ready((h_out, c_out))

    # Pure-JAX reference (same semantics as the torch forward).
    def ref_map(x):
        inf_rep = jnp.broadcast_to(infersent[None], (L, B, nli_dim))
        cat = jnp.concatenate([x, inf_rep], axis=2)
        return jax.nn.relu(cat @ params["h_weight"].T + params["h_bias"])

    assert h_out.shape == (L, B, hidden_size) and c_out.shape == (L, B, hidden_size)
    assert jnp.allclose(h_out, ref_map(h), atol=1e-5)
    assert jnp.allclose(c_out, ref_map(c), atol=1e-5)
    print("KERNEL_OK")
</pallas_src>

<mosaic_0001>
module attributes {stable_mosaic.version = 11 : i64} {
  func.func @_nli_mapper_kernel(%arg0: i32, %arg1: i32, %arg2: memref<8x32xf32, #tpu.memory_space<vmem>>, %arg3: memref<8x32xf32, #tpu.memory_space<vmem>>, %arg4: memref<8x128xf32, #tpu.memory_space<vmem>>, %arg5: memref<32x128xf32, #tpu.memory_space<vmem>>, %arg6: memref<8x128xf32, #tpu.memory_space<vmem>>, %arg7: memref<8x128xf32, #tpu.memory_space<vmem>>) attributes {dimension_semantics = [#tpu.dimension_semantics<parallel>, #tpu.dimension_semantics<parallel>], iteration_bounds = array<i64: 1, 1>, scalar_prefetch = 0 : i64, scratch_operands = 0 : i64, tpu.core_type = #tpu.core_type<tc>, window_params = [{transform_indices = @transform_0, window_bounds = array<i64: 8, 32>}, {transform_indices = @transform_1, window_bounds = array<i64: 8, 32>}, {transform_indices = @transform_2, window_bounds = array<i64: 8, 128>}, {transform_indices = @transform_3, window_bounds = array<i64: 32, 128>}, {transform_indices = @transform_4, window_bounds = array<i64: 8, 128>}, {transform_indices = @transform_5, window_bounds = array<i64: 8, 128>}]} {
    %c0 = arith.constant 0 : index
    %c0_0 = arith.constant 0 : index
    %0 = vector.load %arg5[%c0, %c0_0] : memref<32x128xf32, #tpu.memory_space<vmem>>, vector<32x128xf32>
    %c0_1 = arith.constant 0 : index
    %c0_2 = arith.constant 0 : index
    %1 = vector.load %arg4[%c0_1, %c0_2] : memref<8x128xf32, #tpu.memory_space<vmem>>, vector<8x128xf32>
    %c0_3 = arith.constant 0 : index
    %c0_4 = arith.constant 0 : index
    %2 = vector.load %arg2[%c0_3, %c0_4] : memref<8x32xf32, #tpu.memory_space<vmem>>, vector<8x32xf32>
    %cst = arith.constant dense<0.000000e+00> : vector<8x128xf32>
    %3 = tpu.matmul %2, %0, %cst {dimension_numbers = #tpu.dot_dimension_numbers<[1], [0], [0], [1], [0, 0, 1, 1], [], []>} : vector<8x32xf32>, vector<32x128xf32>, vector<8x128xf32> -> vector<8x128xf32>
    %4 = arith.addf %3, %1 : vector<8x128xf32>
    %c0_5 = arith.constant 0 : index
    %c0_6 = arith.constant 0 : index
    %5 = vector.load %arg3[%c0_5, %c0_6] : memref<8x32xf32, #tpu.memory_space<vmem>>, vector<8x32xf32>
    %cst_7 = arith.constant dense<0.000000e+00> : vector<8x128xf32>
    %6 = tpu.matmul %5, %0, %cst_7 {dimension_numbers = #tpu.dot_dimension_numbers<[1], [0], [0], [1], [0, 0, 1, 1], [], []>} : vector<8x32xf32>, vector<32x128xf32>, vector<8x128xf32> -> vector<8x128xf32>
    %7 = arith.addf %6, %1 : vector<8x128xf32>
    %cst_8 = arith.constant 0.000000e+00 : f32
    %8 = vector.broadcast %cst_8 : f32 to vector<8x128xf32>
    %9 = arith.maximumf %4, %8 : vector<8x128xf32>
    %c0_9 = arith.constant 0 : index
    %c0_10 = arith.constant 0 : index
    %10 = vector.load %arg6[%c0_9, %c0_10] : memref<8x128xf32, #tpu.memory_space<vmem>>, vector<8x128xf32>
    tpu.vector_store %arg6[%c0_9, %c0_10], %9 {strides = array<i32>} : memref<8x128xf32, #tpu.memory_space<vmem>>, vector<8x128xf32>,
    %cst_11 = arith.constant 0.000000e+00 : f32
    %11 = vector.broadcast %cst_11 : f32 to vector<8x128xf32>
    %12 = arith.maximumf %7, %11 : vector<8x128xf32>
    %c0_12 = arith.constant 0 : index
    %c0_13 = arith.constant 0 : index
    %13 = vector.load %arg7[%c0_12, %c0_13] : memref<8x128xf32, #tpu.memory_space<vmem>>, vector<8x128xf32>
    tpu.vector_store %arg7[%c0_12, %c0_13], %12 {strides = array<i32>} : memref<8x128xf32, #tpu.memory_space<vmem>>, vector<8x128xf32>,
    return
  }
  func.func @transform_0(%arg0: i32, %arg1: i32) -> (i32, i32) {
    %c0_i32 = arith.constant 0 : i32
    %c0_i32_0 = arith.constant 0 : i32
    return %arg1, %c0_i32 : i32, i32
  }
  func.func @transform_1(%arg0: i32, %arg1: i32) -> (i32, i32) {
    %c0_i32 = arith.constant 0 : i32
    %c0_i32_0 = arith.constant 0 : i32
    return %arg1, %c0_i32 : i32, i32
  }
  func.func @transform_2(%arg0: i32, %arg1: i32) -> (i32, i32) {
    %c0_i32 = arith.constant 0 : i32
    return %arg1, %arg0 : i32, i32
  }
  func.func @transform_3(%arg0: i32, %arg1: i32) -> (i32, i32) {
    %c0_i32 = arith.constant 0 : i32
    %c0_i32_0 = arith.constant 0 : i32
    return %c0_i32, %arg0 : i32, i32
  }
  func.func @transform_4(%arg0: i32, %arg1: i32) -> (i32, i32) {
    %c0_i32 = arith.constant 0 : i32
    return %arg1, %arg0 : i32, i32
  }
  func.func @transform_5(%arg0: i32, %arg1: i32) -> (i32, i32) {
    %c0_i32 = arith.constant 0 : i32
    return %arg1, %arg0 : i32, i32
  }
}

</mosaic_0001>

<llo_original>
// kernel: lstm_nli_mapper_forward.1
$region0: #{lstm_nli_mapper_forward.1}
  #allocation0 [shape = 'u32[]', space=smem, size = 0x4, offset = 0x4, fixed_abs, tag = 'smem constant byte address 0x4 - core index']
  #allocation1 [shape = 'u32[144,128]{1,0:T(1,128)}', space=vmem, size = 0x12000, scoped, tag = 'internal scratch']
  %s0 = inlined_call_operand.vmem [shape: f32[8,32], index: 0, kind: input, shape index: {}]
  %s1 = inlined_call_operand.vmem [shape: f32[8,32], index: 1, kind: input, shape index: {}]
  %s2 = inlined_call_operand.vmem [shape: f32[8,128], index: 2, kind: input, shape index: {}]
  %s3 = inlined_call_operand.vmem [shape: f32[32,128], index: 3, kind: input, shape index: {}]
  %s4 = inlined_call_operand.hbm [shape: f32[8,128], index: 4, kind: output, shape index: {0}]
  %s5 = inlined_call_operand.hbm [shape: f32[8,128], index: 5, kind: output, shape index: {1}]
  %6 = xla_tuple %s4, %s5
  %s7 = sld [smem:[#allocation0]]
  $region34: #{lstm_nli_mapper_forward.1} parent=0
    _
  %s9 = ssub.s32 1, %s7
  %s10 = scalar_select 0, %s9, %s7
  $region1: #{lstm_nli_mapper_forward.1} parent=0
    #allocation2 [shape = 'u8[4096]{0}', space=vmem, size = 0x1000, scoped, tag = 'output window, operand 0, single buffered']
    #allocation3 [shape = 's32[1]{0}', space=sflag, size = 0x4, scoped, tag = 'scoped memory for lstm_nli_mapper_forward.1']
    #allocation4 [shape = 'u8[4096]{0}', space=vmem, size = 0x1000, scoped, tag = 'output window, operand 1, single buffered']
    #allocation5 [shape = 's32[1]{0}', space=sflag, size = 0x4, scoped, tag = 'scoped memory for lstm_nli_mapper_forward.1']
    %11 = vsyncpa [#allocation3], 0
    %12 = vsyncpa [#allocation5], 0
    // Predicated region
    $region2: #{lstm_nli_mapper_forward.1} parent=1 // pred_check
      _
    $region3: #{lstm_nli_mapper_forward.1} parent=1 // pred_check_branch
      %14 = sbr.rel (0) target = $region5
    $region4: #{lstm_nli_mapper_forward.1} parent=1 // pred_region
      _
    $region5: #{lstm_nli_mapper_forward.1} parent=1 // pred_fallthru
      _
    // Predicated region
    $region6: #{lstm_nli_mapper_forward.1} parent=1 // pred_check
      _
    $region7: #{lstm_nli_mapper_forward.1} parent=1 // pred_check_branch
      %16 = sbr.rel (0) target = $region9
    $region8: #{lstm_nli_mapper_forward.1} parent=1 // pred_region
      _
    $region9: #{lstm_nli_mapper_forward.1} parent=1 // pred_fallthru
      _
    // Predicated region
    $region10: #{lstm_nli_mapper_forward.1} parent=1 // pred_check
      _
    $region11: #{lstm_nli_mapper_forward.1} parent=1 // pred_check_branch
      %18 = sbr.rel (0) target = $region13
    $region12: #{lstm_nli_mapper_forward.1} parent=1 // pred_region
      _
    $region13: #{lstm_nli_mapper_forward.1} parent=1 // pred_fallthru
      _
    // Predicated region
    $region14: #{lstm_nli_mapper_forward.1} parent=1 // pred_check
      _
    $region15: #{lstm_nli_mapper_forward.1} parent=1 // pred_check_branch
      %20 = sbr.rel (0) target = $region17
    $region16: #{lstm_nli_mapper_forward.1} parent=1 // pred_region
      _
    $region17: #{lstm_nli_mapper_forward.1} parent=1 // pred_fallthru
      _
    %v21 = vld [vmem:[%s3] sm:$0xff]
    %v22 = vld [vmem:[%s3 + $0x8] sm:$0xff]
    %v23 = vld [vmem:[%s3 + $0x10] sm:$0xff]
    %v24 = vld [vmem:[%s3 + $0x18] sm:$0xff]
    %v25 = vld [vmem:[%s2] sm:$0xff]
    %v26 = vld [vmem:[%s0] sm:$0xff]
    %vm27 = vcmask 261120
    %v29 = vsel %vm27, %v26, 0
    %31 = vmatprep.subr.mxu0 0.0
    %32 = vmatpush1.msra.mxu0 0.0
    %33 = vmatprep.subr.mxu0 0.0
    %34 = vmatpush1.msra.mxu0 0.0
    %35 = vmatprep.subr.mxu0 0.0
    %36 = vmatpush1.msra.mxu0 0.0
    %37 = vmatprep.subr.mxu0 0.0
    %38 = vmatpush1.msra.mxu0 0.0
    %39 = vmatprep.subr.mxu0 0.0
    %40 = vmatpush1.msra.mxu0 0.0
    %41 = vmatprep.subr.mxu0 0.0
    %42 = vmatpush1.msra.mxu0 0.0
    %43 = vmatprep.subr.mxu0 0.0
    %44 = vmatpush1.msra.mxu0 0.0
    %45 = vmatprep.subr.mxu0 0.0
    %46 = vmatpush1.msra.mxu0 0.0
    %47 = vmatprep.subr.mxu0 0.0
    %48 = vmatpush1.msra.mxu0 0.0
    %49 = vmatprep.subr.mxu0 0.0
    %50 = vmatpush1.msra.mxu0 0.0
    %51 = vmatprep.subr.mxu0 0.0
    %52 = vmatpush1.msra.mxu0 0.0
    %53 = vmatprep.subr.mxu0 0.0
    %54 = vmatpush1.msra.mxu0 0.0
    %55 = vmatprep.subr.mxu0 0.0
    %56 = vmatpush1.msra.mxu0 %v24
    %57 = vmatprep.subr.mxu0 0.0
    %58 = vmatpush1.msra.mxu0 %v23
    %59 = vmatprep.subr.mxu0 0.0
    %60 = vmatpush1.msra.mxu0 %v22
    %61 = vmatprep.subr.mxu0 0.0
    %62 = vmatpush1.msra.mxu0 %v21
    %63 = vmatprep.subr.mxu0 0.0
    %64 = vmatpush2.msra.mxu0 0.0
    %65 = vmatprep.subr.mxu0 0.0
    %66 = vmatpush2.msra.mxu0 0.0
    %67 = vmatprep.subr.mxu0 0.0
    %68 = vmatpush2.msra.mxu0 0.0
    %69 = vmatprep.subr.mxu0 0.0
    %70 = vmatpush2.msra.mxu0 0.0
    %71 = vmatprep.subr.mxu0 0.0
    %72 = vmatpush2.msra.mxu0 0.0
    %73 = vmatprep.subr.mxu0 0.0
    %74 = vmatpush2.msra.mxu0 0.0
    %75 = vmatprep.subr.mxu0 0.0
    %76 = vmatpush2.msra.mxu0 0.0
    %77 = vmatprep.subr.mxu0 0.0
    %78 = vmatpush2.msra.mxu0 0.0
    %79 = vmatprep.subr.mxu0 0.0
    %80 = vmatpush2.msra.mxu0 0.0
    %81 = vmatprep.subr.mxu0 0.0
    %82 = vmatpush2.msra.mxu0 0.0
    %83 = vmatprep.subr.mxu0 0.0
    %84 = vmatpush2.msra.mxu0 0.0
    %85 = vmatprep.subr.mxu0 0.0
    %86 = vmatpush2.msra.mxu0 0.0
    %87 = vmatprep.subr.mxu0 0.0
    %88 = vmatpush2.msra.mxu0 0.0
    %89 = vmatprep.subr.mxu0 0.0
    %90 = vmatpush2.msra.mxu0 0.0
    %91 = vmatprep.subr.mxu0 0.0
    %92 = vmatpush2.msra.mxu0 0.0
    %93 = vmatprep.subr.mxu0 0.0
    %94 = vmatpush2.msra.mxu0 0.0
    %95 = vmatprep.mubr.f32.mxu0 0.0
    %96 = vmatmul.mubr.f32.gmra.mxu0 %v29
    %v97 = vpop.f32.mrf.mxu0
    %v98 = vadd.f32 %v25, %v97
    %v99 = vpop.f32.mrf.mxu0
    %100 = vdwg.mxu0
    %v101 = vld [vmem:[%s1] sm:$0xff]
    %v103 = vsel %vm27, %v101, 0
    %105 = vmatprep.subr.mxu0 0.0
    %106 = vmatpush1.msra.mxu0 0.0
    %107 = vmatprep.subr.mxu0 0.0
    %108 = vmatpush1.msra.mxu0 0.0
    %109 = vmatprep.subr.mxu0 0.0
    %110 = vmatpush1.msra.mxu0 0.0
    %111 = vmatprep.subr.mxu0 0.0
    %112 = vmatpush1.msra.mxu0 0.0
    %113 = vmatprep.subr.mxu0 0.0
    %114 = vmatpush1.msra.mxu0 0.0
    %115 = vmatprep.subr.mxu0 0.0
    %116 = vmatpush1.msra.mxu0 0.0
    %117 = vmatprep.subr.mxu0 0.0
    %118 = vmatpush1.msra.mxu0 0.0
    %119 = vmatprep.subr.mxu0 0.0
    %120 = vmatpush1.msra.mxu0 0.0
    %121 = vmatprep.subr.mxu0 0.0
    %122 = vmatpush1.msra.mxu0 0.0
    %123 = vmatprep.subr.mxu0 0.0
    %124 = vmatpush1.msra.mxu0 0.0
    %125 = vmatprep.subr.mxu0 0.0
    %126 = vmatpush1.msra.mxu0 0.0
    %127 = vmatprep.subr.mxu0 0.0
    %128 = vmatpush1.msra.mxu0 0.0
    %129 = vmatprep.subr.mxu0 0.0
    %130 = vmatpush1.msra.mxu0 %v24
    %131 = vmatprep.subr.mxu0 0.0
    %132 = vmatpush1.msra.mxu0 %v23
    %133 = vmatprep.subr.mxu0 0.0
    %134 = vmatpush1.msra.mxu0 %v22
    %135 = vmatprep.subr.mxu0 0.0
    %136 = vmatpush1.msra.mxu0 %v21
    %137 = vmatprep.subr.mxu0 0.0
    %138 = vmatpush2.msra.mxu0 0.0
    %139 = vmatprep.subr.mxu0 0.0
    %140 = vmatpush2.msra.mxu0 0.0
    %141 = vmatprep.subr.mxu0 0.0
    %142 = vmatpush2.msra.mxu0 0.0
    %143 = vmatprep.subr.mxu0 0.0
    %144 = vmatpush2.msra.mxu0 0.0
    %145 = vmatprep.subr.mxu0 0.0
    %146 = vmatpush2.msra.mxu0 0.0
    %147 = vmatprep.subr.mxu0 0.0
    %148 = vmatpush2.msra.mxu0 0.0
    %149 = vmatprep.subr.mxu0 0.0
    %150 = vmatpush2.msra.mxu0 0.0
    %151 = vmatprep.subr.mxu0 0.0
    %152 = vmatpush2.msra.mxu0 0.0
    %153 = vmatprep.subr.mxu0 0.0
    %154 = vmatpush2.msra.mxu0 0.0
    %155 = vmatprep.subr.mxu0 0.0
    %156 = vmatpush2.msra.mxu0 0.0
    %157 = vmatprep.subr.mxu0 0.0
    %158 = vmatpush2.msra.mxu0 0.0
    %159 = vmatprep.subr.mxu0 0.0
    %160 = vmatpush2.msra.mxu0 0.0
    %161 = vmatprep.subr.mxu0 0.0
    %162 = vmatpush2.msra.mxu0 0.0
    %163 = vmatprep.subr.mxu0 0.0
    %164 = vmatpush2.msra.mxu0 0.0
    %165 = vmatprep.subr.mxu0 0.0
    %166 = vmatpush2.msra.mxu0 0.0
    %167 = vmatprep.subr.mxu0 0.0
    %168 = vmatpush2.msra.mxu0 0.0
    %169 = vmatprep.mubr.f32.mxu0 0.0
    %170 = vmatmul.mubr.f32.gmra.mxu0 %v103
    %v171 = vpop.f32.mrf.mxu0
    %v172 = vadd.f32 %v25, %v171
    %v173 = vpop.f32.mrf.mxu0
    %174 = vdwg.mxu0
    %v175 = vmax.f32 %v98, 0.0
    %176 = vst [vmem:[#allocation2] sm:$0xff] %v175
    %v177 = vmax.f32 %v172, 0.0
    %178 = vst [vmem:[#allocation4] sm:$0xff] %v177
    // Predicated region
    $region18: #{lstm_nli_mapper_forward.1} parent=1 // pred_check
      _
    $region19: #{lstm_nli_mapper_forward.1} parent=1 // pred_check_branch
      %180 = sbr.rel (0) target = $region21
    $region20: #{lstm_nli_mapper_forward.1} parent=1 // pred_region
      %s182 = ssub.s32 128, 128
      %183 = vsyncadd [#allocation3], %s182
      %s185 = sshll.u32 [#allocation2], 4
      %s186 = int_to_ptr.vmem [resolvable:$true] %s185
      %188 = dma.vmem_to_hbm [thread:$0]  %s186, 128, %s4, [#allocation3]
    $region21: #{lstm_nli_mapper_forward.1} parent=1 // pred_fallthru
      _
    // Predicated region
    $region22: #{lstm_nli_mapper_forward.1} parent=1 // pred_check
      _
    $region23: #{lstm_nli_mapper_forward.1} parent=1 // pred_check_branch
      %190 = sbr.rel (0) target = $region25
    $region24: #{lstm_nli_mapper_forward.1} parent=1 // pred_region
      %s192 = ssub.s32 128, 128
      %193 = vsyncadd [#allocation5], %s192
      %s195 = sshll.u32 [#allocation4], 4
      %s196 = int_to_ptr.vmem [resolvable:$true] %s195
      %198 = dma.vmem_to_hbm [thread:$0]  %s196, 128, %s5, [#allocation5]
    $region25: #{lstm_nli_mapper_forward.1} parent=1 // pred_fallthru
      _
    // Predicated region
    $region26: #{lstm_nli_mapper_forward.1} parent=1 // pred_check
      _
    $region27: #{lstm_nli_mapper_forward.1} parent=1 // pred_check_branch
      %200 = sbr.rel (0) target = $region29
    $region28: #{lstm_nli_mapper_forward.1} parent=1 // pred_region
      %201 = dma.done [#allocation3], 128
    $region29: #{lstm_nli_mapper_forward.1} parent=1 // pred_fallthru
      _
    // Predicated region
    $region30: #{lstm_nli_mapper_forward.1} parent=1 // pred_check
      _
    $region31: #{lstm_nli_mapper_forward.1} parent=1 // pred_check_branch
      %203 = sbr.rel (0) target = $region33
    $region32: #{lstm_nli_mapper_forward.1} parent=1 // pred_region
      %204 = dma.done [#allocation5], 128
    $region33: #{lstm_nli_mapper_forward.1} parent=1 // pred_fallthru
      _
    %205 = vsyncpa [#allocation3], 1
    %206 = vsyncpa [#allocation5], 1

</llo_original>
